<compile_context>
chip_gen: v7x
topology: tpu7x:2x2x1
jax: 0.10.0
libtpu: 0.0.40
codegen_flags: <defaults>
</compile_context>

<pallas_src>
import functools

import jax
import jax.numpy as jnp
import numpy as np
from jax.experimental import pallas as pl
from jax.experimental.pallas import tpu as pltpu

_LANES = 128
_SUBLANES = 8
_TILE_ROWS = 2048        # ~1 MiB f32 block for the tiled two-pass path
_FUSE_MAX_ROWS = 8192    # <= 4 MiB f32 block -> single fused kernel
_VMEM_LIMIT_BYTES = 32 * 1024 * 1024


def _ceil_div(a, b):
    return -(-a // b)


# ---------------------------------------------------------------------------
# Kernels
# ---------------------------------------------------------------------------
def _fused_kernel(x_ref, o_ref, *, n_levels):
    """Whole tensor in one block: min/max + fake-quant, single HBM read."""
    x = x_ref[...].astype(jnp.float32)
    mn = jnp.min(x)
    mx = jnp.max(x)
    rng = mx - mn
    # Matches torch exactly (no zero-range guard, same rounding).
    xr = (x - mn) / rng
    v = jnp.floor(xr * n_levels + 0.5) / n_levels
    o_ref[...] = (v * rng + mn).astype(o_ref.dtype)


def _partial_minmax_kernel(x_ref, mn_ref, mx_ref):
    """Per-block partial min/max reduced to a (8,128) vreg tile (VPU only)."""
    x = x_ref[...].astype(jnp.float32)
    tr = x.shape[0]
    x3 = x.reshape(tr // _SUBLANES, _SUBLANES, _LANES)
    mn_ref[...] = jnp.min(x3, axis=0)[None]   # (1, 8, 128)
    mx_ref[...] = jnp.max(x3, axis=0)[None]


def _apply_kernel(mm_ref, x_ref, o_ref, *, n_levels):
    """Elementwise min-max fake quantization using scalar min/max from SMEM."""
    mn = mm_ref[0]
    mx = mm_ref[1]
    rng = mx - mn                               # hoisted scalar
    x = x_ref[...].astype(jnp.float32)
    # Keep the exact division (bit-parity with the torch reference).
    xr = (x - mn) / rng
    v = jnp.floor(xr * n_levels + 0.5) / n_levels
    o_ref[...] = (v * rng + mn).astype(o_ref.dtype)


def _sign_kernel(x_ref, o_ref):
    """bits == 1 path: sign(x) - 1."""
    x = x_ref[...].astype(jnp.float32)
    o_ref[...] = (jnp.sign(x) - 1.0).astype(o_ref.dtype)


# ---------------------------------------------------------------------------
# Wrapper == NormalQuant.forward with quant_func = min_max_quantize
# ---------------------------------------------------------------------------
def normal_quant_forward(x, bits):
    assert bits >= 1, bits
    orig_shape = x.shape
    orig_dtype = x.dtype
    total = int(np.prod(orig_shape))

    rows = _ceil_div(total, _LANES)

    # Choose grid / tile so the last block is (nearly) full: g steps of tr rows.
    if rows <= _FUSE_MAX_ROWS:
        g = 1
        tr = _ceil_div(rows, _SUBLANES) * _SUBLANES
    else:
        g = _ceil_div(rows, _TILE_ROWS)
        tr = _ceil_div(_ceil_div(rows, g), _SUBLANES) * _SUBLANES
    rows_padded = g * tr
    padded_total = rows_padded * _LANES

    xf = x.reshape(total)
    if padded_total != total:
        # Edge padding is neutral for min/max and gets sliced off afterwards.
        xf = jnp.pad(xf, (0, padded_total - total), mode="edge")
    x2 = xf.reshape(rows_padded, _LANES)

    row_spec = pl.BlockSpec((tr, _LANES), lambda i: (i, 0))
    cparams = pltpu.CompilerParams(
        dimension_semantics=("parallel",),
        vmem_limit_bytes=_VMEM_LIMIT_BYTES,
    )

    if bits == 1:
        out2 = pl.pallas_call(
            _sign_kernel,
            out_shape=jax.ShapeDtypeStruct((rows_padded, _LANES), orig_dtype),
            grid=(g,),
            in_specs=[row_spec],
            out_specs=row_spec,
            compiler_params=cparams,
        )(x2)
    else:
        n_levels = float(2.0 ** bits - 1.0)

        if g == 1:
            # Fused single-block path: x read from HBM exactly once.
            out2 = pl.pallas_call(
                functools.partial(_fused_kernel, n_levels=n_levels),
                out_shape=jax.ShapeDtypeStruct((rows_padded, _LANES), orig_dtype),
                grid=(1,),
                in_specs=[row_spec],
                out_specs=row_spec,
                compiler_params=cparams,
            )(x2)
        else:
            # Pass 1: per-block (8,128) partial min/max, parallel over grid.
            part_spec = pl.BlockSpec((1, _SUBLANES, _LANES), lambda i: (i, 0, 0))
            pmn, pmx = pl.pallas_call(
                _partial_minmax_kernel,
                out_shape=(
                    jax.ShapeDtypeStruct((g, _SUBLANES, _LANES), jnp.float32),
                    jax.ShapeDtypeStruct((g, _SUBLANES, _LANES), jnp.float32),
                ),
                grid=(g,),
                in_specs=[row_spec],
                out_specs=(part_spec, part_spec),
                compiler_params=cparams,
            )(x2)
            mm = jnp.stack([jnp.min(pmn), jnp.max(pmx)]).astype(jnp.float32)

            # Pass 2: elementwise fake quantization with scalars from SMEM.
            out2 = pl.pallas_call(
                functools.partial(_apply_kernel, n_levels=n_levels),
                out_shape=jax.ShapeDtypeStruct((rows_padded, _LANES), orig_dtype),
                grid=(g,),
                in_specs=[
                    pl.BlockSpec(memory_space=pltpu.MemorySpace.SMEM),
                    row_spec,
                ],
                out_specs=row_spec,
                compiler_params=cparams,
            )(mm, x2)

    out = out2.reshape(padded_total)
    if padded_total != total:
        out = out[:total]
    return out.reshape(orig_shape)


# Pure-JAX reference (mirrors torch min_max_quantize) for validation.
def _reference_min_max_quantize(x, bits):
    if bits == 1:
        return (jnp.sign(x) - 1.0).astype(x.dtype)
    x32 = x.astype(jnp.float32)
    mn = jnp.min(x32)
    mx = jnp.max(x32)
    n = 2.0 ** bits - 1.0
    xr = (x32 - mn) / (mx - mn)
    v = jnp.floor(xr * n + 0.5) / n
    return (v * (mx - mn) + mn).astype(x.dtype)


if __name__ == "__main__":
    key = jax.random.PRNGKey(0)
    k1, k2, k3 = jax.random.split(key, 3)

    # Small NCHW conv-activation input: fused single-kernel path.
    x_small = jax.random.normal(k1, (2, 4, 16, 16), dtype=jnp.float32)
    out = jax.block_until_ready(normal_quant_forward(x_small, 8))
    ref = _reference_min_max_quantize(x_small, 8)
    np.testing.assert_allclose(np.asarray(out), np.asarray(ref),
                               rtol=1e-6, atol=1e-6)
    assert out.shape == x_small.shape and out.dtype == x_small.dtype

    # Larger, non-1024-divisible tensor: exercises edge padding + the tiled
    # two-pass (parallel partial min/max + apply) path.
    x_big = jax.random.normal(k2, (9, 13, 101, 101), dtype=jnp.float32)
    out_big = jax.block_until_ready(normal_quant_forward(x_big, 4))
    ref_big = _reference_min_max_quantize(x_big, 4)
    np.testing.assert_allclose(np.asarray(out_big), np.asarray(ref_big),
                               rtol=1e-6, atol=1e-6)

    # bits == 1 path.
    x_b1 = jax.random.normal(k3, (2, 4, 16, 16), dtype=jnp.float32)
    out_b1 = jax.block_until_ready(normal_quant_forward(x_b1, 1))
    ref_b1 = _reference_min_max_quantize(x_b1, 1)
    np.testing.assert_allclose(np.asarray(out_b1), np.asarray(ref_b1),
                               rtol=1e-6, atol=1e-6)

    print("KERNEL_OK")
</pallas_src>

<mosaic_0001>
module attributes {stable_mosaic.version = 11 : i64} {
  func.func @_fused_kernel(%arg0: i32, %arg1: memref<16x128xf32, #tpu.memory_space<vmem>>, %arg2: memref<16x128xf32, #tpu.memory_space<vmem>>) attributes {dimension_semantics = [#tpu.dimension_semantics<parallel>], iteration_bounds = array<i64: 1>, scalar_prefetch = 0 : i64, scratch_operands = 0 : i64, tpu.core_type = #tpu.core_type<tc>, window_params = [{transform_indices = @transform_0, window_bounds = array<i64: 16, 128>}, {transform_indices = @transform_1, window_bounds = array<i64: 16, 128>}]} {
    %c0 = arith.constant 0 : index
    %c0_0 = arith.constant 0 : index
    %0 = vector.load %arg1[%c0, %c0_0] : memref<16x128xf32, #tpu.memory_space<vmem>>, vector<16x128xf32>
    %1 = vector.shape_cast %0 : vector<16x128xf32> to vector<1x16x128xf32>
    %cst = arith.constant dense<0x7F800000> : vector<1xf32>
    %2 = vector.multi_reduction <minimumf>, %1, %cst [1, 2] : vector<1x16x128xf32> to vector<1xf32>
    %3 = vector.shape_cast %2 : vector<1xf32> to vector<1x1x1xf32>
    %4 = vector.extract %3[0, 0, 0] : f32 from vector<1x1x1xf32>
    %5 = vector.shape_cast %0 : vector<16x128xf32> to vector<1x16x128xf32>
    %cst_1 = arith.constant dense<0xFF800000> : vector<1xf32>
    %6 = vector.multi_reduction <maximumf>, %5, %cst_1 [1, 2] : vector<1x16x128xf32> to vector<1xf32>
    %7 = vector.shape_cast %6 : vector<1xf32> to vector<1x1x1xf32>
    %8 = vector.extract %7[0, 0, 0] : f32 from vector<1x1x1xf32>
    %9 = arith.subf %8, %4 : f32
    %10 = vector.broadcast %4 : f32 to vector<16x128xf32>
    %11 = arith.subf %0, %10 : vector<16x128xf32>
    %12 = vector.broadcast %9 : f32 to vector<16x128xf32>
    %13 = arith.divf %11, %12 : vector<16x128xf32>
    %cst_2 = arith.constant 2.550000e+02 : f32
    %14 = vector.broadcast %cst_2 : f32 to vector<16x128xf32>
    %15 = arith.mulf %13, %14 : vector<16x128xf32>
    %cst_3 = arith.constant 5.000000e-01 : f32
    %16 = vector.broadcast %cst_3 : f32 to vector<16x128xf32>
    %17 = arith.addf %15, %16 : vector<16x128xf32>
    %18 = math.floor %17 : vector<16x128xf32>
    %cst_4 = arith.constant 2.550000e+02 : f32
    %19 = vector.broadcast %cst_4 : f32 to vector<16x128xf32>
    %20 = arith.divf %18, %19 : vector<16x128xf32>
    %21 = vector.broadcast %9 : f32 to vector<16x128xf32>
    %22 = arith.mulf %20, %21 : vector<16x128xf32>
    %23 = vector.broadcast %4 : f32 to vector<16x128xf32>
    %24 = arith.addf %22, %23 : vector<16x128xf32>
    %c0_5 = arith.constant 0 : index
    %c0_6 = arith.constant 0 : index
    %25 = vector.load %arg2[%c0_5, %c0_6] : memref<16x128xf32, #tpu.memory_space<vmem>>, vector<16x128xf32>
    tpu.vector_store %arg2[%c0_5, %c0_6], %24 {strides = array<i32>} : memref<16x128xf32, #tpu.memory_space<vmem>>, vector<16x128xf32>,
    return
  }
  func.func @transform_0(%arg0: i32) -> (i32, i32) {
    %c0_i32 = arith.constant 0 : i32
    %c0_i32_0 = arith.constant 0 : i32
    return %arg0, %c0_i32 : i32, i32
  }
  func.func @transform_1(%arg0: i32) -> (i32, i32) {
    %c0_i32 = arith.constant 0 : i32
    %c0_i32_0 = arith.constant 0 : i32
    return %arg0, %c0_i32 : i32, i32
  }
}

</mosaic_0001>

<llo_original>
// kernel: tpu_custom_call.1
$region0: #{tpu_custom_call.1}
  #allocation0 [shape = 'u32[]', space=smem, size = 0x4, offset = 0x4, fixed_abs, tag = 'smem constant byte address 0x4 - core index']
  #allocation1 [shape = 'u32[144,128]{1,0:T(1,128)}', space=vmem, size = 0x12000, scoped, tag = 'internal scratch']
  %s0 = inlined_call_operand.hbm [shape: f32[16,128], index: 0, kind: input, shape index: {}]
  %s1 = inlined_call_operand.hbm [shape: f32[16,128], index: 1, kind: output, shape index: {}]
  %s2 = sld [smem:[#allocation0]]
  $region18: #{tpu_custom_call.1} parent=0
    _
  %s4 = ssub.s32 1, %s2
  %s5 = scalar_select 0, %s4, %s2
  $region1: #{tpu_custom_call.1} parent=0
    #allocation2 [shape = 'u8[8192]{0}', space=vmem, size = 0x2000, scoped, tag = 'input window, operand 0, single buffered']
    #allocation3 [shape = 's32[1]{0}', space=sflag, size = 0x4, scoped, tag = 'scoped memory for tpu_custom_call.1']
    #allocation4 [shape = 's32[1]{0}', space=sflag, size = 0x4, scoped, tag = 'scoped memory for tpu_custom_call.1']
    #allocation5 [shape = 'u8[8192]{0}', space=vmem, size = 0x2000, scoped, tag = 'output window, operand 0, single buffered']
    %6 = vsyncpa [#allocation3], 0
    %7 = vsyncpa [#allocation4], 0
    // Predicated region
    $region2: #{tpu_custom_call.1} parent=1 // pred_check
      _
    $region3: #{tpu_custom_call.1} parent=1 // pred_check_branch
      %9 = sbr.rel (0) target = $region5
    $region4: #{tpu_custom_call.1} parent=1 // pred_region
      %s11 = ssub.s32 256, 256
      %12 = vsyncadd [#allocation3], %s11
      %s13 = sshll.u32 [#allocation2], 4
      %s14 = int_to_ptr.vmem [resolvable:$true] %s13
      %19 = dma.hbm_to_vmem [thread:$0]  %s0, 256, %s14, [#allocation3], 128, 128, 8
    $region5: #{tpu_custom_call.1} parent=1 // pred_fallthru
      _
    // Predicated region
    $region6: #{tpu_custom_call.1} parent=1 // pred_check
      _
    $region7: #{tpu_custom_call.1} parent=1 // pred_check_branch
      %21 = sbr.rel (0) target = $region9
    $region8: #{tpu_custom_call.1} parent=1 // pred_region
      %22 = dma.done [#allocation3], 256
    $region9: #{tpu_custom_call.1} parent=1 // pred_fallthru
      _
    %v23 = vld [vmem:[#allocation2] sm:$0xff]
    %v24 = vld [vmem:[#allocation2 + $0x8] sm:$0xff]
    %v25 = vmin.f32 %v23, %v24
    %26 = vmin.xlane.f32.xlu0 %v25
    %v27 = vpop.xlane.xlu0 %26
    %v28 = vrot.slane %v27, 4
    %v29 = vmin.f32 %v27, %v28
    %v30 = vrot.slane %v29, 2
    %v31 = vmin.f32 %v29, %v30
    %v32 = vrot.slane %v31, 1
    %v33 = vmin.f32 %v31, %v32
    %s34 = vtos %v33
    %v35 = vmax.f32 %v23, %v24
    %36 = vmax.xlane.f32.xlu0 %v35
    %v37 = vpop.xlane.xlu0 %36
    %v38 = vrot.slane %v37, 4
    %v39 = vmax.f32 %v37, %v38
    %v40 = vrot.slane %v39, 2
    %v41 = vmax.f32 %v39, %v40
    %v42 = vrot.slane %v41, 1
    %v43 = vmax.f32 %v41, %v42
    %s44 = vtos %v43
    %s45 = ssub.f32 %s44, %s34
    %v46 = vstv %s34
    %v47 = vsub.f32 %v23, %v46
    %v48 = vsub.f32 %v24, %v46
    %v49 = vstv %s45
    %v50 = vrcp.pop %v49
    %v51 = vmul.f32 %v47, %v50
    %v52 = vmul.f32 %v48, %v50
    %v53 = vmul.f32 %v51, 255.0
    %v54 = vmul.f32 %v52, 255.0
    %v55 = vadd.f32 %v53, 0.5
    %v56 = vadd.f32 %v54, 0.5
    %v57 = vfloor.f32 %v55
    %v58 = vfloor.f32 %v56
    %v59 = vrcp.pop 255.0
    %v60 = vmul.f32 %v57, %v59
    %v61 = vmul.f32 %v58, %v59
    %v62 = vmul.f32 %v60, %v49
    %v63 = vmul.f32 %v61, %v49
    %v64 = vadd.f32 %v62, %v46
    %v65 = vadd.f32 %v63, %v46
    %66 = vst [vmem:[#allocation5] sm:$0xff] %v64
    %67 = vst [vmem:[#allocation5 + $0x8] sm:$0xff] %v65
    // Predicated region
    $region10: #{tpu_custom_call.1} parent=1 // pred_check
      _
    $region11: #{tpu_custom_call.1} parent=1 // pred_check_branch
      %69 = sbr.rel (0) target = $region13
    $region12: #{tpu_custom_call.1} parent=1 // pred_region
      %s71 = ssub.s32 256, 256
      %72 = vsyncadd [#allocation4], %s71
      %s73 = sshll.u32 [#allocation5], 4
      %s74 = int_to_ptr.vmem [resolvable:$true] %s73
      %79 = dma.vmem_to_hbm [thread:$0]  %s74, 256, %s1, [#allocation4], 128, 128, 8
    $region13: #{tpu_custom_call.1} parent=1 // pred_fallthru
      _
    // Predicated region
    $region14: #{tpu_custom_call.1} parent=1 // pred_check
      _
    $region15: #{tpu_custom_call.1} parent=1 // pred_check_branch
      %81 = sbr.rel (0) target = $region17
    $region16: #{tpu_custom_call.1} parent=1 // pred_region
      %82 = dma.done [#allocation4], 256
    $region17: #{tpu_custom_call.1} parent=1 // pred_fallthru
      _
    %83 = vsyncpa [#allocation3], 1
    %84 = vsyncpa [#allocation4], 1

</llo_original>
